<compile_context>
chip_gen: v7x
topology: tpu7x:2x2x1
jax: 0.10.0
libtpu: 0.0.40
codegen_flags: <defaults>
</compile_context>

<pallas_src>
import jax
import jax.numpy as jnp
from jax.experimental import pallas as pl
from jax.experimental.pallas import tpu as pltpu

_LANE = 128
_MIB = 1024 * 1024


def _round_up(x, m):
    return (x + m - 1) // m * m


def _sublane_multiple(dtype):
    """Minimum sublane tile for a dtype: 8 for 4-byte, 16 for 2-byte, 32 for 1-byte."""
    return 8 * (4 // jnp.dtype(dtype).itemsize)


def _vmem_capacity_bytes():
    try:
        return int(pltpu.get_tpu_info().vmem_capacity_bytes)
    except Exception:
        return 64 * _MIB  # conservative fallback (v7x per-TC VMEM)


def _pad2(a, shape, dtype):
    a = a.astype(dtype)
    if a.shape == shape:
        return a
    return jnp.zeros(shape, dtype).at[: a.shape[0], : a.shape[1]].set(a)


# --------------------------------------------------------------------------- #
# Kernels
# --------------------------------------------------------------------------- #
def _head_fused_kernel(x_ref, w1_ref, b1_ref, w2_ref, b2_ref, o_ref):
    # dense: x @ W1, bf16 operands on the MXU, f32 accumulation.
    h = jnp.dot(x_ref[...], w1_ref[...], preferred_element_type=jnp.float32)
    # bias + tanh in f32 (EUP slot, overlaps the MXU).
    h = jnp.tanh(h + b1_ref[...])
    # out_proj: tanh(h) @ W2 (cast activations back to the MXU dtype).
    out = jnp.dot(h.astype(w2_ref.dtype), w2_ref[...],
                  preferred_element_type=jnp.float32)
    o_ref[...] = (out + b2_ref[...]).astype(o_ref.dtype)


def _head_split_kernel(x_ref, w1_ref, b1_ref, w2_ref, b2_ref, o_ref, acc_ref):
    # Hidden dimension split over grid axis 1 ("arbitrary"):
    #   out = sum_n tanh(x @ W1[:, n] + b1[n]) @ W2[n, :]   (+ b2 at the end).
    n = pl.program_id(1)

    @pl.when(n == 0)
    def _():
        acc_ref[...] = jnp.zeros_like(acc_ref)

    h = jnp.dot(x_ref[...], w1_ref[...], preferred_element_type=jnp.float32)
    h = jnp.tanh(h + b1_ref[...])
    acc_ref[...] += jnp.dot(h.astype(w2_ref.dtype), w2_ref[...],
                            preferred_element_type=jnp.float32)

    @pl.when(n == pl.num_programs(1) - 1)
    def _():
        o_ref[...] = (acc_ref[...] + b2_ref[...]).astype(o_ref.dtype)


# --------------------------------------------------------------------------- #
# Wrappers
# --------------------------------------------------------------------------- #
def prepare_classification_head_params(w1, b1, w2, b2, *, compute_dtype=jnp.bfloat16):
    """Pad + cast the head weights ONCE (call at model init, not per forward).

    Weights stored as (in_features, out_features); biases reshaped to (1, out).
    Matmul operands go to `compute_dtype` (bf16 feeds the MXU at full rate);
    biases stay f32 and are added to the f32 MXU accumulator.
    """
    dim = w1.shape[0]
    num_labels = w2.shape[1]
    Dp = _round_up(dim, _LANE)
    Lp = _round_up(num_labels, _LANE)
    b1 = jnp.reshape(b1, (1, -1))
    b2 = jnp.reshape(b2, (1, -1))
    return {
        "w1": _pad2(w1, (Dp, Dp), compute_dtype),
        "b1": _pad2(b1, (1, Dp), jnp.float32),
        "w2": _pad2(w2, (Dp, Lp), compute_dtype),
        "b2": _pad2(b2, (1, Lp), jnp.float32),
        "dim": dim,
        "num_labels": num_labels,
    }


def classification_head(x, params, *, tb=256, force_split=False):
    """out = tanh(x @ W1 + b1) @ W2 + b2, fused in a single pallas_call."""
    w1p, b1p, w2p, b2p = params["w1"], params["b1"], params["w2"], params["b2"]
    dim, num_labels = params["dim"], params["num_labels"]
    Dp, Lp = w1p.shape[0], w2p.shape[1]
    compute_dtype = w1p.dtype
    out_dtype = x.dtype

    B = x.shape[0]
    sub = _sublane_multiple(compute_dtype)

    # Batch tile: multiple of the dtype sublane tile, capped at `tb`, and chosen so
    # the batch grid has >= 2 steps whenever B allows (keeps both v7x TensorCores
    # busy via the "parallel" grid axis).
    if B <= sub:
        TB = sub
    else:
        TB = min(_round_up(tb, sub),
                 _round_up(pl.cdiv(B, 2), sub),
                 _round_up(B, sub))
    Bp = _round_up(B, TB)

    # Only x is padded / cast per call (weights were prepared once at init).
    xp = _pad2(x, (Bp, Dp), compute_dtype)

    c_isz = jnp.dtype(compute_dtype).itemsize
    o_isz = jnp.dtype(out_dtype).itemsize
    vmem_cap = _vmem_capacity_bytes()

    # Fused-path footprint: double-buffered x/out tiles, single-buffered resident
    # weights (pl.Buffered(1)), biases padded to 8 sublanes of f32.
    fused_bytes = (2 * TB * Dp * c_isz + 2 * TB * Lp * o_isz
                   + Dp * Dp * c_isz + Dp * Lp * c_isz
                   + 8 * Dp * 4 + 8 * Lp * 4)

    use_split = force_split or fused_bytes > int(0.7 * vmem_cap)
    resident = pl.Buffered(buffer_count=1)

    if not use_split:
        vmem_limit = int(min(max(fused_bytes + 4 * _MIB, 8 * _MIB),
                             int(0.85 * vmem_cap)))
        out = pl.pallas_call(
            _head_fused_kernel,
            out_shape=jax.ShapeDtypeStruct((Bp, Lp), out_dtype),
            grid=(Bp // TB,),
            in_specs=[
                pl.BlockSpec((TB, Dp), lambda i: (i, 0)),                           # x tile (pipelined)
                pl.BlockSpec((Dp, Dp), lambda i: (0, 0), pipeline_mode=resident),   # W1 resident
                pl.BlockSpec((1, Dp), lambda i: (0, 0), pipeline_mode=resident),    # b1 resident
                pl.BlockSpec((Dp, Lp), lambda i: (0, 0), pipeline_mode=resident),   # W2 resident
                pl.BlockSpec((1, Lp), lambda i: (0, 0), pipeline_mode=resident),    # b2 resident
            ],
            out_specs=pl.BlockSpec((TB, Lp), lambda i: (i, 0)),
            compiler_params=pltpu.CompilerParams(
                dimension_semantics=("parallel",),
                vmem_limit_bytes=vmem_limit,
            ),
        )(xp, w1p, b1p, w2p, b2p)
    else:
        # Hidden-dim split: grid = (batch tiles, hidden tiles); hidden is the
        # reduction axis feeding an f32 accumulator scratch.
        def split_bytes(tn):
            return (2 * TB * Dp * c_isz          # x tile (double-buffered)
                    + 2 * Dp * tn * c_isz        # W1 column tile (double-buffered)
                    + 2 * tn * Lp * c_isz        # W2 row tile (double-buffered)
                    + 2 * 8 * tn * 4 + 8 * Lp * 4  # b1 (dbl) + b2 (single), 8-sublane padded
                    + 2 * TB * Lp * o_isz        # out tile (double-buffered)
                    + TB * Lp * 4)               # f32 accumulator scratch

        TN = _LANE
        for cand in (1024, 512, 256, 128):
            if Dp % cand == 0 and split_bytes(cand) <= int(0.7 * vmem_cap):
                TN = cand
                break
        vmem_limit = int(min(max(split_bytes(TN) + 4 * _MIB, 8 * _MIB),
                             int(0.85 * vmem_cap)))
        out = pl.pallas_call(
            _head_split_kernel,
            out_shape=jax.ShapeDtypeStruct((Bp, Lp), out_dtype),
            grid=(Bp // TB, Dp // TN),
            in_specs=[
                pl.BlockSpec((TB, Dp), lambda i, n: (i, 0)),   # x tile, constant over n
                pl.BlockSpec((Dp, TN), lambda i, n: (0, n)),   # W1 column block
                pl.BlockSpec((1, TN), lambda i, n: (0, n)),    # b1 column block
                pl.BlockSpec((TN, Lp), lambda i, n: (n, 0)),   # W2 row block
                pl.BlockSpec((1, Lp), lambda i, n: (0, 0), pipeline_mode=resident),  # b2 resident
            ],
            out_specs=pl.BlockSpec((TB, Lp), lambda i, n: (i, 0)),
            scratch_shapes=[pltpu.VMEM((TB, Lp), jnp.float32)],
            compiler_params=pltpu.CompilerParams(
                dimension_semantics=("parallel", "arbitrary"),
                vmem_limit_bytes=vmem_limit,
            ),
        )(xp, w1p, b1p, w2p, b2p)

    if (Bp, Lp) != (B, num_labels):
        out = out[:B, :num_labels]
    return out


def _torch_linear_init(key, fan_in, shape_w, shape_b):
    """Deterministic init matching nn.Linear's U(-1/sqrt(fan_in), 1/sqrt(fan_in))."""
    kw, kb = jax.random.split(key)
    bound = 1.0 / jnp.sqrt(fan_in)
    w = jax.random.uniform(kw, shape_w, jnp.float32, -bound, bound)
    b = jax.random.uniform(kb, shape_b, jnp.float32, -bound, bound)
    return w, b


if __name__ == "__main__":
    key = jax.random.PRNGKey(0)
    k_x, k_d, k_o = jax.random.split(key, 3)

    batch, dim, num_labels = 8, 32, 4

    x = jax.random.normal(k_x, (batch, dim), jnp.float32)

    # dense: Linear(dim, dim); out_proj: Linear(dim, num_labels); stored (in, out).
    w1, b1 = _torch_linear_init(k_d, dim, (dim, dim), (1, dim))
    w2, b2 = _torch_linear_init(k_o, dim, (dim, num_labels), (1, num_labels))

    # Pad/cast the weights once (hoisted out of the per-call path).
    params = prepare_classification_head_params(w1, b1, w2, b2)

    out = classification_head(x, params)
    out = jax.block_until_ready(out)

    # Pure-JAX f32 reference (kernel runs the MXU in bf16 -> loose tolerance).
    ref = jnp.tanh(x @ w1 + b1) @ w2 + b2
    assert out.shape == (batch, num_labels)
    assert jnp.allclose(out, ref, atol=5e-2, rtol=5e-2), "fused path mismatch vs reference"

    # Also exercise the hidden-dim-split path (used for large dim on v7x).
    out_split = jax.block_until_ready(classification_head(x, params, force_split=True))
    assert jnp.allclose(out_split, ref, atol=5e-2, rtol=5e-2), "split path mismatch vs reference"

    print("KERNEL_OK")
</pallas_src>

<mosaic_0001>
module attributes {stable_mosaic.version = 11 : i64} {
  func.func @_head_fused_kernel(%arg0: i32, %arg1: memref<16x128xbf16, #tpu.memory_space<vmem>>, %arg2: memref<128x128xbf16, #tpu.memory_space<vmem>>, %arg3: memref<1x128xf32, #tpu.memory_space<vmem>>, %arg4: memref<128x128xbf16, #tpu.memory_space<vmem>>, %arg5: memref<1x128xf32, #tpu.memory_space<vmem>>, %arg6: memref<16x128xf32, #tpu.memory_space<vmem>>) attributes {dimension_semantics = [#tpu.dimension_semantics<parallel>], iteration_bounds = array<i64: 1>, scalar_prefetch = 0 : i64, scratch_operands = 0 : i64, tpu.core_type = #tpu.core_type<tc>, window_params = [{transform_indices = @transform_0, window_bounds = array<i64: 16, 128>}, {pipeline_mode = #tpu.pipeline_mode<synchronous>, transform_indices = @transform_1, window_bounds = array<i64: 128, 128>}, {pipeline_mode = #tpu.pipeline_mode<synchronous>, transform_indices = @transform_2, window_bounds = array<i64: 1, 128>}, {pipeline_mode = #tpu.pipeline_mode<synchronous>, transform_indices = @transform_3, window_bounds = array<i64: 128, 128>}, {pipeline_mode = #tpu.pipeline_mode<synchronous>, transform_indices = @transform_4, window_bounds = array<i64: 1, 128>}, {transform_indices = @transform_5, window_bounds = array<i64: 16, 128>}]} {
    %c0 = arith.constant 0 : index
    %c0_0 = arith.constant 0 : index
    %0 = vector.load %arg1[%c0, %c0_0] : memref<16x128xbf16, #tpu.memory_space<vmem>>, vector<16x128xbf16>
    %c0_1 = arith.constant 0 : index
    %c0_2 = arith.constant 0 : index
    %1 = vector.load %arg2[%c0_1, %c0_2] : memref<128x128xbf16, #tpu.memory_space<vmem>>, vector<128x128xbf16>
    %cst = arith.constant dense<0.000000e+00> : vector<16x128xf32>
    %2 = tpu.matmul %0, %1, %cst {dimension_numbers = #tpu.dot_dimension_numbers<[1], [0], [0], [1], [0, 0, 1, 1], [], []>} : vector<16x128xbf16>, vector<128x128xbf16>, vector<16x128xf32> -> vector<16x128xf32>
    %c0_3 = arith.constant 0 : index
    %c0_4 = arith.constant 0 : index
    %3 = vector.load %arg3[%c0_3, %c0_4] : memref<1x128xf32, #tpu.memory_space<vmem>>, vector<1x128xf32>
    %4 = vector.broadcast %3 : vector<1x128xf32> to vector<16x128xf32>
    %5 = arith.addf %2, %4 : vector<16x128xf32>
    %6 = math.tanh %5 : vector<16x128xf32>
    %7 = arith.truncf %6 : vector<16x128xf32> to vector<16x128xbf16>
    %c0_5 = arith.constant 0 : index
    %c0_6 = arith.constant 0 : index
    %8 = vector.load %arg4[%c0_5, %c0_6] : memref<128x128xbf16, #tpu.memory_space<vmem>>, vector<128x128xbf16>
    %cst_7 = arith.constant dense<0.000000e+00> : vector<16x128xf32>
    %9 = tpu.matmul %7, %8, %cst_7 {dimension_numbers = #tpu.dot_dimension_numbers<[1], [0], [0], [1], [0, 0, 1, 1], [], []>} : vector<16x128xbf16>, vector<128x128xbf16>, vector<16x128xf32> -> vector<16x128xf32>
    %c0_8 = arith.constant 0 : index
    %c0_9 = arith.constant 0 : index
    %10 = vector.load %arg5[%c0_8, %c0_9] : memref<1x128xf32, #tpu.memory_space<vmem>>, vector<1x128xf32>
    %11 = vector.broadcast %10 : vector<1x128xf32> to vector<16x128xf32>
    %12 = arith.addf %9, %11 : vector<16x128xf32>
    %c0_10 = arith.constant 0 : index
    %c0_11 = arith.constant 0 : index
    %13 = vector.load %arg6[%c0_10, %c0_11] : memref<16x128xf32, #tpu.memory_space<vmem>>, vector<16x128xf32>
    tpu.vector_store %arg6[%c0_10, %c0_11], %12 {strides = array<i32>} : memref<16x128xf32, #tpu.memory_space<vmem>>, vector<16x128xf32>,
    return
  }
  func.func @transform_0(%arg0: i32) -> (i32, i32) {
    %c0_i32 = arith.constant 0 : i32
    %c0_i32_0 = arith.constant 0 : i32
    return %arg0, %c0_i32 : i32, i32
  }
  func.func @transform_1(%arg0: i32) -> (i32, i32) {
    %c0_i32 = arith.constant 0 : i32
    %c0_i32_0 = arith.constant 0 : i32
    %c0_i32_1 = arith.constant 0 : i32
    return %c0_i32, %c0_i32_0 : i32, i32
  }
  func.func @transform_2(%arg0: i32) -> (i32, i32) {
    %c0_i32 = arith.constant 0 : i32
    %c0_i32_0 = arith.constant 0 : i32
    %c0_i32_1 = arith.constant 0 : i32
    return %c0_i32, %c0_i32_0 : i32, i32
  }
  func.func @transform_3(%arg0: i32) -> (i32, i32) {
    %c0_i32 = arith.constant 0 : i32
    %c0_i32_0 = arith.constant 0 : i32
    %c0_i32_1 = arith.constant 0 : i32
    return %c0_i32, %c0_i32_0 : i32, i32
  }
  func.func @transform_4(%arg0: i32) -> (i32, i32) {
    %c0_i32 = arith.constant 0 : i32
    %c0_i32_0 = arith.constant 0 : i32
    %c0_i32_1 = arith.constant 0 : i32
    return %c0_i32, %c0_i32_0 : i32, i32
  }
  func.func @transform_5(%arg0: i32) -> (i32, i32) {
    %c0_i32 = arith.constant 0 : i32
    %c0_i32_0 = arith.constant 0 : i32
    return %arg0, %c0_i32 : i32, i32
  }
}

</mosaic_0001>

<llo_original>
// kernel: tpu_custom_call.1
$region0: #{tpu_custom_call.1}
  #allocation0 [shape = 'u32[]', space=smem, size = 0x4, offset = 0x4, fixed_abs, tag = 'smem constant byte address 0x4 - core index']
  #allocation1 [shape = 'u32[144,128]{1,0:T(1,128)}', space=vmem, size = 0x12000, scoped, tag = 'internal scratch']
  %s0 = inlined_call_operand.hbm [shape: bf16[16,128], index: 0, kind: input, shape index: {}]
  %s1 = inlined_call_operand.hbm [shape: bf16[128,128], index: 1, kind: input, shape index: {}]
  %s2 = inlined_call_operand.vmem [shape: f32[1,128], index: 2, kind: input, shape index: {}]
  %s3 = inlined_call_operand.hbm [shape: bf16[128,128], index: 3, kind: input, shape index: {}]
  %s4 = inlined_call_operand.vmem [shape: f32[1,128], index: 4, kind: input, shape index: {}]
  %s5 = inlined_call_operand.hbm [shape: f32[16,128], index: 5, kind: output, shape index: {}]
  %s6 = sld [smem:[#allocation0]]
  $region42: #{tpu_custom_call.1} parent=0
    _
  %s8 = ssub.s32 1, %s6
  %s9 = scalar_select 0, %s8, %s6
  $region1: #{tpu_custom_call.1} parent=0
    #allocation2 [shape = 'u8[4096]{0}', space=vmem, size = 0x1000, scoped, tag = 'input window, operand 0, single buffered']
    #allocation3 [shape = 's32[1]{0}', space=sflag, size = 0x4, scoped, tag = 'scoped memory for tpu_custom_call.1']
    #allocation4 [shape = 's32[1]{0}', space=sflag, size = 0x4, scoped, tag = 'scoped memory for tpu_custom_call.1']
    #allocation5 [shape = 'u8[32768]{0}', space=vmem, size = 0x8000, scoped, tag = 'input window, operand 1, single buffered']
    #allocation6 [shape = 's32[1]{0}', space=sflag, size = 0x4, scoped, tag = 'scoped memory for tpu_custom_call.1']
    #allocation7 [shape = 'u8[32768]{0}', space=vmem, size = 0x8000, scoped, tag = 'input window, operand 3, single buffered']
    #allocation8 [shape = 'u8[8192]{0}', space=vmem, size = 0x2000, scoped, tag = 'output window, operand 0, single buffered']
    %10 = vsyncpa [#allocation3], 0
    %11 = vsyncpa [#allocation6], 0
    %12 = vsyncpa [#allocation4], 0
    // Predicated region
    $region2: #{tpu_custom_call.1} parent=1 // pred_check
      _
    $region3: #{tpu_custom_call.1} parent=1 // pred_check_branch
      %14 = sbr.rel (0) target = $region5
    $region4: #{tpu_custom_call.1} parent=1 // pred_region
      %s16 = ssub.s32 128, 128
      %17 = vsyncadd [#allocation3], %s16
      %s18 = sshll.u32 [#allocation2], 4
      %s19 = int_to_ptr.vmem [resolvable:$true] %s18
      %24 = dma.hbm_to_vmem [thread:$0]  %s0, 128, %s19, [#allocation3], 64, 64, 4
    $region5: #{tpu_custom_call.1} parent=1 // pred_fallthru
      _
    // Predicated region
    $region6: #{tpu_custom_call.1} parent=1 // pred_check
      _
    $region7: #{tpu_custom_call.1} parent=1 // pred_check_branch
      %26 = sbr.rel (0) target = $region9
    $region8: #{tpu_custom_call.1} parent=1 // pred_region
      %s28 = ssub.s32 1024, 1024
      %29 = vsyncadd [#allocation6], %s28
      %s30 = sshll.u32 [#allocation5], 4
      %s31 = int_to_ptr.vmem [resolvable:$true] %s30
      %36 = dma.hbm_to_vmem [thread:$0]  %s1, 1024, %s31, [#allocation6], 64, 64, 4
    $region9: #{tpu_custom_call.1} parent=1 // pred_fallthru
      _
    // Predicated region
    $region10: #{tpu_custom_call.1} parent=1 // pred_check
      _
    $region11: #{tpu_custom_call.1} parent=1 // pred_check_branch
      %38 = sbr.rel (0) target = $region13
    $region12: #{tpu_custom_call.1} parent=1 // pred_region
      _
    $region13: #{tpu_custom_call.1} parent=1 // pred_fallthru
      _
    // Predicated region
    $region14: #{tpu_custom_call.1} parent=1 // pred_check
      _
    $region15: #{tpu_custom_call.1} parent=1 // pred_check_branch
      %40 = sbr.rel (0) target = $region17
    $region16: #{tpu_custom_call.1} parent=1 // pred_region
      %s42 = ssub.s32 1024, 1024
      %43 = vsyncadd [#allocation6], %s42
      %s44 = sshll.u32 [#allocation7], 4
      %s45 = int_to_ptr.vmem [resolvable:$true] %s44
      %50 = dma.hbm_to_vmem [thread:$0]  %s3, 1024, %s45, [#allocation6], 64, 64, 4
    $region17: #{tpu_custom_call.1} parent=1 // pred_fallthru
      _
    // Predicated region
    $region18: #{tpu_custom_call.1} parent=1 // pred_check
      _
    $region19: #{tpu_custom_call.1} parent=1 // pred_check_branch
      %52 = sbr.rel (0) target = $region21
    $region20: #{tpu_custom_call.1} parent=1 // pred_region
      _
    $region21: #{tpu_custom_call.1} parent=1 // pred_fallthru
      _
    // Predicated region
    $region22: #{tpu_custom_call.1} parent=1 // pred_check
      _
    $region23: #{tpu_custom_call.1} parent=1 // pred_check_branch
      %54 = sbr.rel (0) target = $region25
    $region24: #{tpu_custom_call.1} parent=1 // pred_region
      %55 = dma.done [#allocation3], 128
    $region25: #{tpu_custom_call.1} parent=1 // pred_fallthru
      _
    // Predicated region
    $region26: #{tpu_custom_call.1} parent=1 // pred_check
      _
    $region27: #{tpu_custom_call.1} parent=1 // pred_check_branch
      %57 = sbr.rel (0) target = $region29
    $region28: #{tpu_custom_call.1} parent=1 // pred_region
      %58 = dma.done [#allocation6], 1024
    $region29: #{tpu_custom_call.1} parent=1 // pred_fallthru
      _
    // Predicated region
    $region30: #{tpu_custom_call.1} parent=1 // pred_check
      _
    $region31: #{tpu_custom_call.1} parent=1 // pred_check_branch
      %60 = sbr.rel (0) target = $region33
    $region32: #{tpu_custom_call.1} parent=1 // pred_region
      %61 = dma.done [#allocation6], 1024
    $region33: #{tpu_custom_call.1} parent=1 // pred_fallthru
      _
    %v63 = vld [vmem:[#allocation2] sm:$0xf]
    %v64 = vld [vmem:[#allocation2 + $0x4] sm:$0xf]
    %v65 = vld [vmem:[#allocation5] sm:$0xf]
    %v66 = vld [vmem:[#allocation5 + $0x4] sm:$0xf]
    %v67 = vld [vmem:[#allocation5 + $0x8] sm:$0xf]
    %v68 = vld [vmem:[#allocation5 + $0xc] sm:$0xf]
    %v69 = vld [vmem:[#allocation5 + $0x10] sm:$0xf]
    %v70 = vld [vmem:[#allocation5 + $0x14] sm:$0xf]
    %v71 = vld [vmem:[#allocation5 + $0x18] sm:$0xf]
    %v72 = vld [vmem:[#allocation5 + $0x1c] sm:$0xf]
    %v73 = vld [vmem:[#allocation5 + $0x20] sm:$0xf]
    %v74 = vld [vmem:[#allocation5 + $0x24] sm:$0xf]
    %v75 = vld [vmem:[#allocation5 + $0x28] sm:$0xf]
    %v76 = vld [vmem:[#allocation5 + $0x2c] sm:$0xf]
    %v77 = vld [vmem:[#allocation5 + $0x30] sm:$0xf]
    %v78 = vld [vmem:[#allocation5 + $0x34] sm:$0xf]
    %v79 = vld [vmem:[#allocation5 + $0x38] sm:$0xf]
    %v80 = vld [vmem:[#allocation5 + $0x3c] sm:$0xf]
    %v81 = vld [vmem:[%s2] sm:$0x1]
    %v83 = vlaneseq
    %v84 = vshrl.u32 %v83, 7
    %v85 = vsub.s32 0, %v84
    %v86 = vrot.slane %v81, %v85
    %v90 = vunpack.c.l.b16 %v63
    %v91 = vunpack.c.l.b16 %v64
    %v92 = vpack.c.b16 %v91, %v90
    %v110 = vunpack.c.l.b16 %v65
    %v111 = vunpack.c.l.b16 %v66
    %v112 = vunpack.c.l.b16 %v67
    %v113 = vunpack.c.l.b16 %v68
    %v114 = vunpack.c.l.b16 %v69
    %v115 = vunpack.c.l.b16 %v70
    %v116 = vunpack.c.l.b16 %v71
    %v117 = vunpack.c.l.b16 %v72
    %v118 = vunpack.c.l.b16 %v73
    %v119 = vunpack.c.l.b16 %v74
    %v120 = vunpack.c.l.b16 %v75
    %v121 = vunpack.c.l.b16 %v76
    %v122 = vunpack.c.l.b16 %v77
    %v123 = vunpack.c.l.b16 %v78
    %v124 = vunpack.c.l.b16 %v79
    %v125 = vunpack.c.l.b16 %v80
    %v126 = vpack.c.b16 %v111, %v110
    %v127 = vpack.c.b16 %v113, %v112
    %v128 = vpack.c.b16 %v115, %v114
    %v129 = vpack.c.b16 %v117, %v116
    %v130 = vpack.c.b16 %v119, %v118
    %v131 = vpack.c.b16 %v121, %v120
    %v132 = vpack.c.b16 %v123, %v122
    %v133 = vpack.c.b16 %v125, %v124
    %142 = vmatprep.subr.bf16.mxu0 0
    %143 = vmatpush1.bf16.msra.mxu0 %v126
    %144 = vmatprep.subr.bf16.mxu0 0
    %145 = vmatpush1.bf16.msra.mxu0 %v127
    %146 = vmatprep.subr.bf16.mxu0 0
    %147 = vmatpush1.bf16.msra.mxu0 %v128
    %148 = vmatprep.subr.bf16.mxu0 0
    %149 = vmatpush1.bf16.msra.mxu0 %v129
    %150 = vmatprep.subr.bf16.mxu0 0
    %151 = vmatpush1.bf16.msra.mxu0 %v130
    %152 = vmatprep.subr.bf16.mxu0 0
    %153 = vmatpush1.bf16.msra.mxu0 %v131
    %154 = vmatprep.subr.bf16.mxu0 0
    %155 = vmatpush1.bf16.msra.mxu0 %v132
    %156 = vmatprep.subr.bf16.mxu0 0
    %157 = vmatpush1.bf16.msra.mxu0 %v133
    %158 = vmatprep.subr.bf16.mxu0 0
    %159 = vmatpush1.bf16.msra.mxu0 0
    %160 = vmatprep.subr.bf16.mxu0 0
    %161 = vmatpush1.bf16.msra.mxu0 0
    %162 = vmatprep.subr.bf16.mxu0 0
    %163 = vmatpush1.bf16.msra.mxu0 0
    %164 = vmatprep.subr.bf16.mxu0 0
    %165 = vmatpush1.bf16.msra.mxu0 0
    %166 = vmatprep.subr.bf16.mxu0 0
    %167 = vmatpush1.bf16.msra.mxu0 0
    %168 = vmatprep.subr.bf16.mxu0 0
    %169 = vmatpush1.bf16.msra.mxu0 0
    %170 = vmatprep.subr.bf16.mxu0 0
    %171 = vmatpush1.bf16.msra.mxu0 0
    %172 = vmatprep.subr.bf16.mxu0 0
    %173 = vmatpush1.bf16.msra.mxu0 0
    %174 = vmatprep.mubr.bf16.mxu0 0
    %175 = vmatmul.mubr.bf16.gmra.mrb[0].mxu0 %v92
    %v176 = vpop.f32.mrb[0].mxu0
    %v177 = vadd.f32 %v86, %v176
    %v178 = vpop.f32.mrb[0].mxu0
    %v179 = vpop.f32.mrb[0].mxu0
    %v180 = vadd.f32 %v86, %v179
    %v181 = vpop.f32.mrb[0].mxu0
    %182 = vdwg.mxu0
    %v183 = vtanh.pop %v177
    %v184 = vtanh.pop %v180
    %v185 = vpack.c.bf16 %v184, %v183
    %v186 = vld [vmem:[#allocation7] sm:$0xf]
    %v187 = vld [vmem:[#allocation7 + $0x4] sm:$0xf]
    %v188 = vld [vmem:[#allocation7 + $0x8] sm:$0xf]
    %v189 = vld [vmem:[#allocation7 + $0xc] sm:$0xf]
    %v190 = vld [vmem:[#allocation7 + $0x10] sm:$0xf]
    %v191 = vld [vmem:[#allocation7 + $0x14] sm:$0xf]
    %v192 = vld [vmem:[#allocation7 + $0x18] sm:$0xf]
    %v193 = vld [vmem:[#allocation7 + $0x1c] sm:$0xf]
    %v194 = vld [vmem:[#allocation7 + $0x20] sm:$0xf]
    %v195 = vld [vmem:[#allocation7 + $0x24] sm:$0xf]
    %v196 = vld [vmem:[#allocation7 + $0x28] sm:$0xf]
    %v197 = vld [vmem:[#allocation7 + $0x2c] sm:$0xf]
    %v198 = vld [vmem:[#allocation7 + $0x30] sm:$0xf]
    %v199 = vld [vmem:[#allocation7 + $0x34] sm:$0xf]
    %v200 = vld [vmem:[#allocation7 + $0x38] sm:$0xf]
    %v201 = vld [vmem:[#allocation7 + $0x3c] sm:$0xf]
    %v202 = vld [vmem:[%s4] sm:$0x1]
    %v204 = vlaneseq
    %v205 = vshrl.u32 %v204, 7
    %v206 = vsub.s32 0, %v205
    %v207 = vrot.slane %v202, %v206
    %v225 = vunpack.c.l.b16 %v186
    %v226 = vunpack.c.l.b16 %v187
    %v227 = vunpack.c.l.b16 %v188
    %v228 = vunpack.c.l.b16 %v189
    %v229 = vunpack.c.l.b16 %v190
    %v230 = vunpack.c.l.b16 %v191
    %v231 = vunpack.c.l.b16 %v192
    %v232 = vunpack.c.l.b16 %v193
    %v233 = vunpack.c.l.b16 %v194
    %v234 = vunpack.c.l.b16 %v195
    %v235 = vunpack.c.l.b16 %v196
    %v236 = vunpack.c.l.b16 %v197
    %v237 = vunpack.c.l.b16 %v198
    %v238 = vunpack.c.l.b16 %v199
    %v239 = vunpack.c.l.b16 %v200
    %v240 = vunpack.c.l.b16 %v201
    %v241 = vpack.c.b16 %v226, %v225
    %v242 = vpack.c.b16 %v228, %v227
    %v243 = vpack.c.b16 %v230, %v229
    %v244 = vpack.c.b16 %v232, %v231
    %v245 = vpack.c.b16 %v234, %v233
    %v246 = vpack.c.b16 %v236, %v235
    %v247 = vpack.c.b16 %v238, %v237
    %v248 = vpack.c.b16 %v240, %v239
    %257 = vmatprep.subr.bf16.mxu0 0
    %258 = vmatpush1.bf16.msra.mxu0 %v241
    %259 = vmatprep.subr.bf16.mxu0 0
    %260 = vmatpush1.bf16.msra.mxu0 %v242
    %261 = vmatprep.subr.bf16.mxu0 0
    %262 = vmatpush1.bf16.msra.mxu0 %v243
    %263 = vmatprep.subr.bf16.mxu0 0
    %264 = vmatpush1.bf16.msra.mxu0 %v244
    %265 = vmatprep.subr.bf16.mxu0 0
    %266 = vmatpush1.bf16.msra.mxu0 %v245
    %267 = vmatprep.subr.bf16.mxu0 0
    %268 = vmatpush1.bf16.msra.mxu0 %v246
    %269 = vmatprep.subr.bf16.mxu0 0
    %270 = vmatpush1.bf16.msra.mxu0 %v247
    %271 = vmatprep.subr.bf16.mxu0 0
    %272 = vmatpush1.bf16.msra.mxu0 %v248
    %273 = vmatprep.subr.bf16.mxu0 0
    %274 = vmatpush1.bf16.msra.mxu0 0
    %275 = vmatprep.subr.bf16.mxu0 0
    %276 = vmatpush1.bf16.msra.mxu0 0
    %277 = vmatprep.subr.bf16.mxu0 0
    %278 = vmatpush1.bf16.msra.mxu0 0
    %279 = vmatprep.subr.bf16.mxu0 0
    %280 = vmatpush1.bf16.msra.mxu0 0
    %281 = vmatprep.subr.bf16.mxu0 0
    %282 = vmatpush1.bf16.msra.mxu0 0
    %283 = vmatprep.subr.bf16.mxu0 0
    %284 = vmatpush1.bf16.msra.mxu0 0
    %285 = vmatprep.subr.bf16.mxu0 0
    %286 = vmatpush1.bf16.msra.mxu0 0
    %287 = vmatprep.subr.bf16.mxu0 0
    %288 = vmatpush1.bf16.msra.mxu0 0
    %289 = vmatprep.mubr.bf16.mxu0 0
    %290 = vmatmul.mubr.bf16.gmra.mrb[0].mxu0 %v185
    %v291 = vpop.f32.mrb[0].mxu0
    %v292 = vadd.f32 %v207, %v291
    %v293 = vpop.f32.mrb[0].mxu0
    %v294 = vpop.f32.mrb[0].mxu0
    %v295 = vadd.f32 %v207, %v294
    %v296 = vpop.f32.mrb[0].mxu0
    %297 = vdwg.mxu0
    %298 = vst [vmem:[#allocation8] sm:$0xff] %v292
    %299 = vst [vmem:[#allocation8 + $0x8] sm:$0xff] %v295
    // Predicated region
    $region34: #{tpu_custom_call.1} parent=1 // pred_check
      _
    $region35: #{tpu_custom_call.1} parent=1 // pred_check_branch
      %301 = sbr.rel (0) target = $region37
    $region36: #{tpu_custom_call.1} parent=1 // pred_region
      %s303 = ssub.s32 256, 256
      %304 = vsyncadd [#allocation4], %s303
      %s305 = sshll.u32 [#allocation8], 4
      %s306 = int_to_ptr.vmem [resolvable:$true] %s305
      %311 = dma.vmem_to_hbm [thread:$0]  %s306, 256, %s5, [#allocation4], 128, 128, 8
    $region37: #{tpu_custom_call.1} parent=1 // pred_fallthru
      _
    // Predicated region
    $region38: #{tpu_custom_call.1} parent=1 // pred_check
      _
    $region39: #{tpu_custom_call.1} parent=1 // pred_check_branch
      %313 = sbr.rel (0) target = $region41
    $region40: #{tpu_custom_call.1} parent=1 // pred_region
      %314 = dma.done [#allocation4], 256
    $region41: #{tpu_custom_call.1} parent=1 // pred_fallthru
      _
    %315 = vsyncpa [#allocation3], 1
    %316 = vsyncpa [#allocation6], 1
    %317 = vsyncpa [#allocation4], 1

</llo_original>
